<compile_context>
chip_gen: v5e
topology: v5e:2x2
jax: 0.10.0
libtpu: 0.0.40
codegen_flags: <defaults>
</compile_context>

<pallas_src>
import functools

import jax
import jax.numpy as jnp
from jax.experimental import pallas as pl
from jax.experimental.pallas import tpu as pltpu

SLOPE = 0.01


def resblock_kernel(x_ref, masks_ref, w1_ref, b1_ref, w2_ref, b2_ref, o_ref,
                    col_ref, *, W, c_pad, cm_pad, slope, compute_dtype):
    """One grid step = one lane-dense slab of images.

    Channels sit on sublanes (zero-padded to the compute-dtype sublane tile),
    flattened (image, y, x) sits on lanes.

    x_ref     : (c_pad,  BHW)       f32            input slab
    masks_ref : (9,      BHW)       compute_dtype  per-tap 0/1 in-bounds masks
    w1_ref    : (cm_pad, 9*c_pad)   compute_dtype  conv1 weights, K = (dy, dx, ci)
    b1_ref    : (cm_pad, 1)         f32
    w2_ref    : (c_pad,  9*cm_pad)  compute_dtype  conv2 weights
    b2_ref    : (c_pad,  1)         f32
    o_ref     : (c_pad,  BHW)       output slab
    col_ref   : (9*max(c_pad,cm_pad), BHW) compute_dtype  im2col scratch (reused)
    """
    bhw = x_ref.shape[-1]

    x = x_ref[...]                      # (c_pad, BHW) f32
    masks = masks_ref[...]              # (9, BHW) compute_dtype, exact 0/1

    def lrelu(v):
        # 2 VPU ops (mul + max) instead of cmp + mul + select; valid since
        # 0 < slope < 1.
        return jnp.maximum(v, slope * v)

    def im2col(v, cin_pad):
        # v: (cin_pad, BHW) f32.  Each 3x3 tap is a constant flat lane shift of
        # the slab; out-of-bounds positions (conv zero-padding, including pixels
        # wrapped across image boundaries) are zeroed by the 0/1 mask.  Taps are
        # cast to compute_dtype per tap and stored into the tile-aligned VMEM
        # scratch -- no f32 im2col slab, bounded live ranges.
        for dy in range(3):
            for dx in range(3):
                t = dy * 3 + dx
                s = (dy - 1) * W + (dx - 1)          # flat spatial shift
                if s == 0:                           # centre tap: always in bounds
                    tap = v.astype(compute_dtype)
                else:
                    rolled = pltpu.roll(v, (-s) % bhw, axis=1)   # XLU lane roll
                    tap = rolled.astype(compute_dtype) * masks[t:t + 1, :]
                col_ref[pl.ds(t * cin_pad, cin_pad), :] = tap
        return col_ref[pl.ds(0, 9 * cin_pad), :]

    # first_layer = LeakyReLU
    a = lrelu(x)

    # conv1: one MXU matmul (cm_pad, 9*c_pad) @ (9*c_pad, BHW), f32 accumulation.
    acc1 = jnp.dot(w1_ref[...], im2col(a, c_pad),
                   preferred_element_type=jnp.float32)
    h = lrelu(acc1 + b1_ref[...])                    # fused bias + mid leaky-relu

    # conv2: one MXU matmul (c_pad, 9*cm_pad) @ (9*cm_pad, BHW).
    acc2 = jnp.dot(w2_ref[...], im2col(h, cm_pad),
                   preferred_element_type=jnp.float32)

    # last_layer = Identity; residual add.  Lane-dense store (BHW % 128 == 0).
    o_ref[...] = (x + acc2 + b2_ref[...]).astype(o_ref.dtype)


def _tap_masks(H, W):
    """(9, H*W) f32: 1 where the (dy,dx)-shifted source pixel is in-bounds."""
    yy = jnp.arange(H)[:, None]
    xx = jnp.arange(W)[None, :]
    rows = []
    for dy in range(3):
        for dx in range(3):
            oy, ox = dy - 1, dx - 1
            ok = ((yy + oy >= 0) & (yy + oy < H) &
                  (xx + ox >= 0) & (xx + ox < W))
            rows.append(ok.reshape(H * W))
    return jnp.stack(rows).astype(jnp.float32)


def _round_up(v, m):
    return ((v + m - 1) // m) * m


def _pick_images_per_step(n, per_image_bytes, budget_bytes=8 << 20):
    """Largest divisor of n whose block stays within a conservative VMEM budget."""
    b = n
    while b > 1 and (n % b != 0 or b * per_image_bytes > budget_bytes):
        b -= 1
    return b


def resblock_forward(x_nchw, params, slope=SLOPE, compute_dtype=jnp.bfloat16):
    """Pallas ResBlock forward.  x_nchw: (N, C, H, W) f32; params in OIHW.

    compute_dtype is the MXU / im2col / mask dtype (accumulation is always f32).
    bf16 is the right default on v6e/v7x; pass jnp.float32 on v5e (no bf16 VPU)
    or when a numerically tight result is required.
    """
    w1, b1, w2, b2 = params            # w1: (Cm, C, 3, 3), w2: (C, Cm, 3, 3)
    N, C, H, W = x_nchw.shape
    Cm = w1.shape[0]
    HW = H * W

    cdt = jnp.dtype(compute_dtype)
    sub = 16 if cdt.itemsize == 2 else 8           # sublane tile of compute_dtype
    c_pad, cm_pad = _round_up(C, sub), _round_up(Cm, sub)
    kp = max(c_pad, cm_pad)

    # Fold as many images as comfortably fit one grid step onto the lane axis
    # (single step for the toy shape).
    per_image_bytes = HW * (2 * c_pad * 4 + 9 * kp * cdt.itemsize
                            + (c_pad + cm_pad) * 4 + 9 * cdt.itemsize)
    B = _pick_images_per_step(N, per_image_bytes)
    G = N // B
    BHW = B * HW

    # (N, C, H, W) -> (G, c_pad, B*HW): channels zero-padded to the sublane tile
    # (so im2col scratch offsets are tile-aligned), images concatenated on lanes.
    x_pad = jnp.pad(x_nchw, ((0, 0), (0, c_pad - C), (0, 0), (0, 0)))
    x_blk = (x_pad.reshape(G, B, c_pad, HW)
             .transpose(0, 2, 1, 3)
             .reshape(G, c_pad, BHW))

    # Per-tap in-bounds masks tiled per image, already in compute_dtype (exact
    # 0/1, so masking after the compute_dtype cast is bit-identical).
    masks = jnp.tile(_tap_masks(H, W), (1, B)).astype(compute_dtype)

    # OIHW -> (Cout_pad, 9*Cin_pad), K ordered (dy, dx, ci) to match im2col.
    w1p = jnp.pad(w1, ((0, cm_pad - Cm), (0, c_pad - C), (0, 0), (0, 0)))
    w2p = jnp.pad(w2, ((0, c_pad - C), (0, cm_pad - Cm), (0, 0), (0, 0)))
    w1m = jnp.transpose(w1p, (0, 2, 3, 1)).reshape(cm_pad, 9 * c_pad).astype(compute_dtype)
    w2m = jnp.transpose(w2p, (0, 2, 3, 1)).reshape(c_pad, 9 * cm_pad).astype(compute_dtype)
    b1c = jnp.pad(b1, (0, cm_pad - Cm)).reshape(cm_pad, 1).astype(jnp.float32)
    b2c = jnp.pad(b2, (0, c_pad - C)).reshape(c_pad, 1).astype(jnp.float32)

    kernel = functools.partial(resblock_kernel, W=W, c_pad=c_pad, cm_pad=cm_pad,
                               slope=slope, compute_dtype=compute_dtype)

    flops = 2 * 9 * HW * N * (C * Cm + Cm * C)
    bytes_accessed = (2 * G * c_pad * BHW * 4                      # x in + out
                      + 9 * BHW * cdt.itemsize                     # masks
                      + (cm_pad * 9 * c_pad + c_pad * 9 * cm_pad) * cdt.itemsize
                      + (cm_pad + c_pad) * 4)                      # biases

    # TODO(synk): production DCVC frame sizes need row-block spatial tiling with
    # a 1-row halo (in-tile shifts instead of full-slab lane rolls), in-kernel
    # iota-generated edge masks, a grid of (N, num_row_blocks) so v7x's two
    # TensorCores are both fed, and vmem_limit_bytes sized per generation
    # (~40-48 MiB live on v7x's 64 MiB VMEM, larger on v5e/v6e's 128 MiB).
    out_blk = pl.pallas_call(
        kernel,
        out_shape=jax.ShapeDtypeStruct((G, c_pad, BHW), x_nchw.dtype),
        grid=(G,),
        in_specs=[
            pl.BlockSpec((None, c_pad, BHW), lambda g: (g, 0, 0)),
            pl.BlockSpec((9, BHW), lambda g: (0, 0)),
            pl.BlockSpec((cm_pad, 9 * c_pad), lambda g: (0, 0)),
            pl.BlockSpec((cm_pad, 1), lambda g: (0, 0)),
            pl.BlockSpec((c_pad, 9 * cm_pad), lambda g: (0, 0)),
            pl.BlockSpec((c_pad, 1), lambda g: (0, 0)),
        ],
        out_specs=pl.BlockSpec((None, c_pad, BHW), lambda g: (g, 0, 0)),
        scratch_shapes=[pltpu.VMEM((9 * kp, BHW), compute_dtype)],
        compiler_params=pltpu.CompilerParams(
            dimension_semantics=("parallel",)),
        cost_estimate=pl.CostEstimate(flops=flops, transcendentals=0,
                                      bytes_accessed=bytes_accessed),
    )(x_blk, masks, w1m, b1c, w2m, b2c)

    out = (out_blk.reshape(G, c_pad, B, HW)
           .transpose(0, 2, 1, 3)
           .reshape(N, c_pad, H, W))[:, :C]
    return out


def resblock_ref(x_nchw, params, slope=SLOPE):
    """Pure-JAX reference mirroring the PyTorch module."""
    w1, b1, w2, b2 = params

    def conv(v, w_oihw, b):
        y = jax.lax.conv_general_dilated(
            v, w_oihw, window_strides=(1, 1), padding=((1, 1), (1, 1)),
            dimension_numbers=("NCHW", "OIHW", "NCHW"))
        return y + b.reshape(1, -1, 1, 1)

    out = jnp.where(x_nchw >= 0, x_nchw, slope * x_nchw)    # first_layer
    out = conv(out, w1, b1)
    out = jnp.where(out >= 0, out, slope * out)             # leaky_relu
    out = conv(out, w2, b2)                                  # last_layer = Identity
    return x_nchw + out


def init_params(key, channel, bottleneck=False):
    """Deterministic synthetic weights, OIHW (same shapes as the nn.Module)."""
    mid = channel // 2 if bottleneck else channel
    k1, k2, k3, k4 = jax.random.split(key, 4)
    w1 = 0.1 * jax.random.normal(k1, (mid, channel, 3, 3), jnp.float32)
    b1 = 0.1 * jax.random.normal(k2, (mid,), jnp.float32)
    w2 = 0.1 * jax.random.normal(k3, (channel, mid, 3, 3), jnp.float32)
    b2 = 0.1 * jax.random.normal(k4, (channel,), jnp.float32)
    return (w1, b1, w2, b2)


if __name__ == "__main__":
    key = jax.random.PRNGKey(0)
    kx, kp = jax.random.split(key)

    N, C, H, W = 2, 4, 16, 16
    x = jax.random.normal(kx, (N, C, H, W), jnp.float32)
    params = init_params(kp, C, bottleneck=False)
    ref = resblock_ref(x, params)

    # f32 MXU / im2col operands: tight check against the pure-JAX reference.
    out_f32 = jax.block_until_ready(
        resblock_forward(x, params, compute_dtype=jnp.float32))
    assert out_f32.shape == (N, C, H, W)
    assert jnp.allclose(out_f32, ref, atol=1e-4, rtol=1e-4)

    # bf16 MXU / im2col operands, f32 accumulation (performance default): loose check.
    out_bf16 = jax.block_until_ready(
        resblock_forward(x, params, compute_dtype=jnp.bfloat16))
    assert out_bf16.shape == (N, C, H, W)
    assert jnp.allclose(out_bf16, ref, atol=1e-1, rtol=1e-1)

    print("KERNEL_OK")
</pallas_src>

<mosaic_0001>
module attributes {stable_mosaic.version = 11 : i64} {
  func.func @resblock_kernel(%arg0: i32, %arg1: memref<1x8x512xf32, #tpu.memory_space<vmem>>, %arg2: memref<9x512xf32, #tpu.memory_space<vmem>>, %arg3: memref<8x72xf32, #tpu.memory_space<vmem>>, %arg4: memref<8x1xf32, #tpu.memory_space<vmem>>, %arg5: memref<8x72xf32, #tpu.memory_space<vmem>>, %arg6: memref<8x1xf32, #tpu.memory_space<vmem>>, %arg7: memref<1x8x512xf32, #tpu.memory_space<vmem>>, %arg8: memref<72x512xf32, #tpu.memory_space<vmem>>) attributes {dimension_semantics = [#tpu.dimension_semantics<parallel>], iteration_bounds = array<i64: 1>, scalar_prefetch = 0 : i64, scratch_operands = 1 : i64, tpu.core_type = #tpu.core_type<tc>, window_params = [{transform_indices = @transform_0, window_bounds = array<i64: 1, 8, 512>}, {pipeline_mode = #tpu.pipeline_mode<synchronous>, transform_indices = @transform_1, window_bounds = array<i64: 9, 512>}, {pipeline_mode = #tpu.pipeline_mode<synchronous>, transform_indices = @transform_2, window_bounds = array<i64: 8, 72>}, {pipeline_mode = #tpu.pipeline_mode<synchronous>, transform_indices = @transform_3, window_bounds = array<i64: 8, 1>}, {pipeline_mode = #tpu.pipeline_mode<synchronous>, transform_indices = @transform_4, window_bounds = array<i64: 8, 72>}, {pipeline_mode = #tpu.pipeline_mode<synchronous>, transform_indices = @transform_5, window_bounds = array<i64: 8, 1>}, {transform_indices = @transform_6, window_bounds = array<i64: 1, 8, 512>}]} {
    %c0 = arith.constant 0 : index
    %c0_0 = arith.constant 0 : index
    %c0_1 = arith.constant 0 : index
    %0 = vector.load %arg1[%c0, %c0_0, %c0_1] : memref<1x8x512xf32, #tpu.memory_space<vmem>>, vector<1x8x512xf32>
    %1 = vector.shape_cast %0 : vector<1x8x512xf32> to vector<8x512xf32>
    %c0_2 = arith.constant 0 : index
    %c0_3 = arith.constant 0 : index
    %2 = vector.load %arg2[%c0_2, %c0_3] : memref<9x512xf32, #tpu.memory_space<vmem>>, vector<9x512xf32>
    %cst = arith.constant 0.00999999977 : f32
    %3 = vector.broadcast %cst : f32 to vector<8x512xf32>
    %4 = arith.mulf %3, %1 : vector<8x512xf32>
    %5 = arith.maximumf %1, %4 : vector<8x512xf32>
    %c0_4 = arith.constant 0 : index
    %c0_5 = arith.constant 0 : index
    %6 = vector.load %arg3[%c0_4, %c0_5] : memref<8x72xf32, #tpu.memory_space<vmem>>, vector<8x72xf32>
    %c17_i32 = arith.constant 17 : i32
    %7 = tpu.dynamic_rotate %5 by %c17_i32 dim 1 : vector<8x512xf32>, i32 -> vector<8x512xf32>
    %8 = vector.extract_strided_slice %2 {offsets = [0, 0], sizes = [1, 512], strides = [1, 1]} : vector<9x512xf32> to vector<1x512xf32>
    %9 = vector.broadcast %8 : vector<1x512xf32> to vector<8x512xf32>
    %10 = arith.mulf %7, %9 : vector<8x512xf32>
    %c0_6 = arith.constant 0 : index
    %c0_7 = arith.constant 0 : index
    %11 = vector.load %arg8[%c0_6, %c0_7] : memref<72x512xf32, #tpu.memory_space<vmem>>, vector<8x512xf32>
    tpu.vector_store %arg8[%c0_6, %c0_7], %10 {strides = array<i32>} : memref<72x512xf32, #tpu.memory_space<vmem>>, vector<8x512xf32>,
    %c16_i32 = arith.constant 16 : i32
    %12 = tpu.dynamic_rotate %5 by %c16_i32 dim 1 : vector<8x512xf32>, i32 -> vector<8x512xf32>
    %13 = vector.extract_strided_slice %2 {offsets = [1, 0], sizes = [1, 512], strides = [1, 1]} : vector<9x512xf32> to vector<1x512xf32>
    %14 = vector.broadcast %13 : vector<1x512xf32> to vector<8x512xf32>
    %15 = arith.mulf %12, %14 : vector<8x512xf32>
    %c8 = arith.constant 8 : index
    %c0_8 = arith.constant 0 : index
    %16 = vector.load %arg8[%c8, %c0_8] : memref<72x512xf32, #tpu.memory_space<vmem>>, vector<8x512xf32>
    tpu.vector_store %arg8[%c8, %c0_8], %15 {strides = array<i32>} : memref<72x512xf32, #tpu.memory_space<vmem>>, vector<8x512xf32>,
    %c15_i32 = arith.constant 15 : i32
    %17 = tpu.dynamic_rotate %5 by %c15_i32 dim 1 : vector<8x512xf32>, i32 -> vector<8x512xf32>
    %18 = vector.extract_strided_slice %2 {offsets = [2, 0], sizes = [1, 512], strides = [1, 1]} : vector<9x512xf32> to vector<1x512xf32>
    %19 = vector.broadcast %18 : vector<1x512xf32> to vector<8x512xf32>
    %20 = arith.mulf %17, %19 : vector<8x512xf32>
    %c16 = arith.constant 16 : index
    %c0_9 = arith.constant 0 : index
    %21 = vector.load %arg8[%c16, %c0_9] : memref<72x512xf32, #tpu.memory_space<vmem>>, vector<8x512xf32>
    tpu.vector_store %arg8[%c16, %c0_9], %20 {strides = array<i32>} : memref<72x512xf32, #tpu.memory_space<vmem>>, vector<8x512xf32>,
    %c1_i32 = arith.constant 1 : i32
    %22 = tpu.dynamic_rotate %5 by %c1_i32 dim 1 : vector<8x512xf32>, i32 -> vector<8x512xf32>
    %23 = vector.extract_strided_slice %2 {offsets = [3, 0], sizes = [1, 512], strides = [1, 1]} : vector<9x512xf32> to vector<1x512xf32>
    %24 = vector.broadcast %23 : vector<1x512xf32> to vector<8x512xf32>
    %25 = arith.mulf %22, %24 : vector<8x512xf32>
    %c24 = arith.constant 24 : index
    %c0_10 = arith.constant 0 : index
    %26 = vector.load %arg8[%c24, %c0_10] : memref<72x512xf32, #tpu.memory_space<vmem>>, vector<8x512xf32>
    tpu.vector_store %arg8[%c24, %c0_10], %25 {strides = array<i32>} : memref<72x512xf32, #tpu.memory_space<vmem>>, vector<8x512xf32>,
    %c32 = arith.constant 32 : index
    %c0_11 = arith.constant 0 : index
    %27 = vector.load %arg8[%c32, %c0_11] : memref<72x512xf32, #tpu.memory_space<vmem>>, vector<8x512xf32>
    tpu.vector_store %arg8[%c32, %c0_11], %5 {strides = array<i32>} : memref<72x512xf32, #tpu.memory_space<vmem>>, vector<8x512xf32>,
    %c511_i32 = arith.constant 511 : i32
    %28 = tpu.dynamic_rotate %5 by %c511_i32 dim 1 : vector<8x512xf32>, i32 -> vector<8x512xf32>
    %29 = vector.extract_strided_slice %2 {offsets = [5, 0], sizes = [1, 512], strides = [1, 1]} : vector<9x512xf32> to vector<1x512xf32>
    %30 = vector.broadcast %29 : vector<1x512xf32> to vector<8x512xf32>
    %31 = arith.mulf %28, %30 : vector<8x512xf32>
    %c40 = arith.constant 40 : index
    %c0_12 = arith.constant 0 : index
    %32 = vector.load %arg8[%c40, %c0_12] : memref<72x512xf32, #tpu.memory_space<vmem>>, vector<8x512xf32>
    tpu.vector_store %arg8[%c40, %c0_12], %31 {strides = array<i32>} : memref<72x512xf32, #tpu.memory_space<vmem>>, vector<8x512xf32>,
    %c497_i32 = arith.constant 497 : i32
    %33 = tpu.dynamic_rotate %5 by %c497_i32 dim 1 : vector<8x512xf32>, i32 -> vector<8x512xf32>
    %34 = vector.extract_strided_slice %2 {offsets = [6, 0], sizes = [1, 512], strides = [1, 1]} : vector<9x512xf32> to vector<1x512xf32>
    %35 = vector.broadcast %34 : vector<1x512xf32> to vector<8x512xf32>
    %36 = arith.mulf %33, %35 : vector<8x512xf32>
    %c48 = arith.constant 48 : index
    %c0_13 = arith.constant 0 : index
    %37 = vector.load %arg8[%c48, %c0_13] : memref<72x512xf32, #tpu.memory_space<vmem>>, vector<8x512xf32>
    tpu.vector_store %arg8[%c48, %c0_13], %36 {strides = array<i32>} : memref<72x512xf32, #tpu.memory_space<vmem>>, vector<8x512xf32>,
    %c496_i32 = arith.constant 496 : i32
    %38 = tpu.dynamic_rotate %5 by %c496_i32 dim 1 : vector<8x512xf32>, i32 -> vector<8x512xf32>
    %39 = vector.extract_strided_slice %2 {offsets = [7, 0], sizes = [1, 512], strides = [1, 1]} : vector<9x512xf32> to vector<1x512xf32>
    %40 = vector.broadcast %39 : vector<1x512xf32> to vector<8x512xf32>
    %41 = arith.mulf %38, %40 : vector<8x512xf32>
    %c56 = arith.constant 56 : index
    %c0_14 = arith.constant 0 : index
    %42 = vector.load %arg8[%c56, %c0_14] : memref<72x512xf32, #tpu.memory_space<vmem>>, vector<8x512xf32>
    tpu.vector_store %arg8[%c56, %c0_14], %41 {strides = array<i32>} : memref<72x512xf32, #tpu.memory_space<vmem>>, vector<8x512xf32>,
    %c495_i32 = arith.constant 495 : i32
    %43 = tpu.dynamic_rotate %5 by %c495_i32 dim 1 : vector<8x512xf32>, i32 -> vector<8x512xf32>
    %44 = vector.extract_strided_slice %2 {offsets = [8, 0], sizes = [1, 512], strides = [1, 1]} : vector<9x512xf32> to vector<1x512xf32>
    %45 = vector.broadcast %44 : vector<1x512xf32> to vector<8x512xf32>
    %46 = arith.mulf %43, %45 : vector<8x512xf32>
    %c64 = arith.constant 64 : index
    %c0_15 = arith.constant 0 : index
    %47 = vector.load %arg8[%c64, %c0_15] : memref<72x512xf32, #tpu.memory_space<vmem>>, vector<8x512xf32>
    tpu.vector_store %arg8[%c64, %c0_15], %46 {strides = array<i32>} : memref<72x512xf32, #tpu.memory_space<vmem>>, vector<8x512xf32>,
    %c0_16 = arith.constant 0 : index
    %c0_17 = arith.constant 0 : index
    %48 = vector.load %arg8[%c0_16, %c0_17] : memref<72x512xf32, #tpu.memory_space<vmem>>, vector<72x512xf32>
    %cst_18 = arith.constant dense<0.000000e+00> : vector<8x512xf32>
    %49 = tpu.matmul %6, %48, %cst_18 {dimension_numbers = #tpu.dot_dimension_numbers<[1], [0], [0], [1], [0, 0, 1, 1], [], []>} : vector<8x72xf32>, vector<72x512xf32>, vector<8x512xf32> -> vector<8x512xf32>
    %c0_19 = arith.constant 0 : index
    %c0_20 = arith.constant 0 : index
    %50 = vector.load %arg4[%c0_19, %c0_20] : memref<8x1xf32, #tpu.memory_space<vmem>>, vector<8x1xf32>
    %51 = vector.broadcast %50 : vector<8x1xf32> to vector<8x512xf32>
    %52 = arith.addf %49, %51 : vector<8x512xf32>
    %cst_21 = arith.constant 0.00999999977 : f32
    %53 = vector.broadcast %cst_21 : f32 to vector<8x512xf32>
    %54 = arith.mulf %53, %52 : vector<8x512xf32>
    %55 = arith.maximumf %52, %54 : vector<8x512xf32>
    %c0_22 = arith.constant 0 : index
    %c0_23 = arith.constant 0 : index
    %56 = vector.load %arg5[%c0_22, %c0_23] : memref<8x72xf32, #tpu.memory_space<vmem>>, vector<8x72xf32>
    %c17_i32_24 = arith.constant 17 : i32
    %57 = tpu.dynamic_rotate %55 by %c17_i32_24 dim 1 : vector<8x512xf32>, i32 -> vector<8x512xf32>
    %58 = vector.extract_strided_slice %2 {offsets = [0, 0], sizes = [1, 512], strides = [1, 1]} : vector<9x512xf32> to vector<1x512xf32>
    %59 = vector.broadcast %58 : vector<1x512xf32> to vector<8x512xf32>
    %60 = arith.mulf %57, %59 : vector<8x512xf32>
    %c0_25 = arith.constant 0 : index
    %c0_26 = arith.constant 0 : index
    %61 = vector.load %arg8[%c0_25, %c0_26] : memref<72x512xf32, #tpu.memory_space<vmem>>, vector<8x512xf32>
    tpu.vector_store %arg8[%c0_25, %c0_26], %60 {strides = array<i32>} : memref<72x512xf32, #tpu.memory_space<vmem>>, vector<8x512xf32>,
    %c16_i32_27 = arith.constant 16 : i32
    %62 = tpu.dynamic_rotate %55 by %c16_i32_27 dim 1 : vector<8x512xf32>, i32 -> vector<8x512xf32>
    %63 = vector.extract_strided_slice %2 {offsets = [1, 0], sizes = [1, 512], strides = [1, 1]} : vector<9x512xf32> to vector<1x512xf32>
    %64 = vector.broadcast %63 : vector<1x512xf32> to vector<8x512xf32>
    %65 = arith.mulf %62, %64 : vector<8x512xf32>
    %c8_28 = arith.constant 8 : index
    %c0_29 = arith.constant 0 : index
    %66 = vector.load %arg8[%c8_28, %c0_29] : memref<72x512xf32, #tpu.memory_space<vmem>>, vector<8x512xf32>
    tpu.vector_store %arg8[%c8_28, %c0_29], %65 {strides = array<i32>} : memref<72x512xf32, #tpu.memory_space<vmem>>, vector<8x512xf32>,
    %c15_i32_30 = arith.constant 15 : i32
    %67 = tpu.dynamic_rotate %55 by %c15_i32_30 dim 1 : vector<8x512xf32>, i32 -> vector<8x512xf32>
    %68 = vector.extract_strided_slice %2 {offsets = [2, 0], sizes = [1, 512], strides = [1, 1]} : vector<9x512xf32> to vector<1x512xf32>
    %69 = vector.broadcast %68 : vector<1x512xf32> to vector<8x512xf32>
    %70 = arith.mulf %67, %69 : vector<8x512xf32>
    %c16_31 = arith.constant 16 : index
    %c0_32 = arith.constant 0 : index
    %71 = vector.load %arg8[%c16_31, %c0_32] : memref<72x512xf32, #tpu.memory_space<vmem>>, vector<8x512xf32>
    tpu.vector_store %arg8[%c16_31, %c0_32], %70 {strides = array<i32>} : memref<72x512xf32, #tpu.memory_space<vmem>>, vector<8x512xf32>,
    %c1_i32_33 = arith.constant 1 : i32
    %72 = tpu.dynamic_rotate %55 by %c1_i32_33 dim 1 : vector<8x512xf32>, i32 -> vector<8x512xf32>
    %73 = vector.extract_strided_slice %2 {offsets = [3, 0], sizes = [1, 512], strides = [1, 1]} : vector<9x512xf32> to vector<1x512xf32>
    %74 = vector.broadcast %73 : vector<1x512xf32> to vector<8x512xf32>
    %75 = arith.mulf %72, %74 : vector<8x512xf32>
    %c24_34 = arith.constant 24 : index
    %c0_35 = arith.constant 0 : index
    %76 = vector.load %arg8[%c24_34, %c0_35] : memref<72x512xf32, #tpu.memory_space<vmem>>, vector<8x512xf32>
    tpu.vector_store %arg8[%c24_34, %c0_35], %75 {strides = array<i32>} : memref<72x512xf32, #tpu.memory_space<vmem>>, vector<8x512xf32>,
    %c32_36 = arith.constant 32 : index
    %c0_37 = arith.constant 0 : index
    %77 = vector.load %arg8[%c32_36, %c0_37] : memref<72x512xf32, #tpu.memory_space<vmem>>, vector<8x512xf32>
    tpu.vector_store %arg8[%c32_36, %c0_37], %55 {strides = array<i32>} : memref<72x512xf32, #tpu.memory_space<vmem>>, vector<8x512xf32>,
    %c511_i32_38 = arith.constant 511 : i32
    %78 = tpu.dynamic_rotate %55 by %c511_i32_38 dim 1 : vector<8x512xf32>, i32 -> vector<8x512xf32>
    %79 = vector.extract_strided_slice %2 {offsets = [5, 0], sizes = [1, 512], strides = [1, 1]} : vector<9x512xf32> to vector<1x512xf32>
    %80 = vector.broadcast %79 : vector<1x512xf32> to vector<8x512xf32>
    %81 = arith.mulf %78, %80 : vector<8x512xf32>
    %c40_39 = arith.constant 40 : index
    %c0_40 = arith.constant 0 : index
    %82 = vector.load %arg8[%c40_39, %c0_40] : memref<72x512xf32, #tpu.memory_space<vmem>>, vector<8x512xf32>
    tpu.vector_store %arg8[%c40_39, %c0_40], %81 {strides = array<i32>} : memref<72x512xf32, #tpu.memory_space<vmem>>, vector<8x512xf32>,
    %c497_i32_41 = arith.constant 497 : i32
    %83 = tpu.dynamic_rotate %55 by %c497_i32_41 dim 1 : vector<8x512xf32>, i32 -> vector<8x512xf32>
    %84 = vector.extract_strided_slice %2 {offsets = [6, 0], sizes = [1, 512], strides = [1, 1]} : vector<9x512xf32> to vector<1x512xf32>
    %85 = vector.broadcast %84 : vector<1x512xf32> to vector<8x512xf32>
    %86 = arith.mulf %83, %85 : vector<8x512xf32>
    %c48_42 = arith.constant 48 : index
    %c0_43 = arith.constant 0 : index
    %87 = vector.load %arg8[%c48_42, %c0_43] : memref<72x512xf32, #tpu.memory_space<vmem>>, vector<8x512xf32>
    tpu.vector_store %arg8[%c48_42, %c0_43], %86 {strides = array<i32>} : memref<72x512xf32, #tpu.memory_space<vmem>>, vector<8x512xf32>,
    %c496_i32_44 = arith.constant 496 : i32
    %88 = tpu.dynamic_rotate %55 by %c496_i32_44 dim 1 : vector<8x512xf32>, i32 -> vector<8x512xf32>
    %89 = vector.extract_strided_slice %2 {offsets = [7, 0], sizes = [1, 512], strides = [1, 1]} : vector<9x512xf32> to vector<1x512xf32>
    %90 = vector.broadcast %89 : vector<1x512xf32> to vector<8x512xf32>
    %91 = arith.mulf %88, %90 : vector<8x512xf32>
    %c56_45 = arith.constant 56 : index
    %c0_46 = arith.constant 0 : index
    %92 = vector.load %arg8[%c56_45, %c0_46] : memref<72x512xf32, #tpu.memory_space<vmem>>, vector<8x512xf32>
    tpu.vector_store %arg8[%c56_45, %c0_46], %91 {strides = array<i32>} : memref<72x512xf32, #tpu.memory_space<vmem>>, vector<8x512xf32>,
    %c495_i32_47 = arith.constant 495 : i32
    %93 = tpu.dynamic_rotate %55 by %c495_i32_47 dim 1 : vector<8x512xf32>, i32 -> vector<8x512xf32>
    %94 = vector.extract_strided_slice %2 {offsets = [8, 0], sizes = [1, 512], strides = [1, 1]} : vector<9x512xf32> to vector<1x512xf32>
    %95 = vector.broadcast %94 : vector<1x512xf32> to vector<8x512xf32>
    %96 = arith.mulf %93, %95 : vector<8x512xf32>
    %c64_48 = arith.constant 64 : index
    %c0_49 = arith.constant 0 : index
    %97 = vector.load %arg8[%c64_48, %c0_49] : memref<72x512xf32, #tpu.memory_space<vmem>>, vector<8x512xf32>
    tpu.vector_store %arg8[%c64_48, %c0_49], %96 {strides = array<i32>} : memref<72x512xf32, #tpu.memory_space<vmem>>, vector<8x512xf32>,
    %c0_50 = arith.constant 0 : index
    %c0_51 = arith.constant 0 : index
    %98 = vector.load %arg8[%c0_50, %c0_51] : memref<72x512xf32, #tpu.memory_space<vmem>>, vector<72x512xf32>
    %cst_52 = arith.constant dense<0.000000e+00> : vector<8x512xf32>
    %99 = tpu.matmul %56, %98, %cst_52 {dimension_numbers = #tpu.dot_dimension_numbers<[1], [0], [0], [1], [0, 0, 1, 1], [], []>} : vector<8x72xf32>, vector<72x512xf32>, vector<8x512xf32> -> vector<8x512xf32>
    %100 = arith.addf %1, %99 : vector<8x512xf32>
    %c0_53 = arith.constant 0 : index
    %c0_54 = arith.constant 0 : index
    %101 = vector.load %arg6[%c0_53, %c0_54] : memref<8x1xf32, #tpu.memory_space<vmem>>, vector<8x1xf32>
    %102 = vector.broadcast %101 : vector<8x1xf32> to vector<8x512xf32>
    %103 = arith.addf %100, %102 : vector<8x512xf32>
    %c0_55 = arith.constant 0 : index
    %c0_56 = arith.constant 0 : index
    %c0_57 = arith.constant 0 : index
    %104 = vector.load %arg7[%c0_55, %c0_56, %c0_57] : memref<1x8x512xf32, #tpu.memory_space<vmem>>, vector<1x8x512xf32>
    %105 = vector.shape_cast %104 : vector<1x8x512xf32> to vector<8x512xf32>
    %106 = vector.shape_cast %103 : vector<8x512xf32> to vector<1x8x512xf32>
    tpu.vector_store %arg7[%c0_55, %c0_56, %c0_57], %106 {strides = array<i32>} : memref<1x8x512xf32, #tpu.memory_space<vmem>>, vector<1x8x512xf32>,
    return
  }
  func.func @transform_0(%arg0: i32) -> (i32, i32, i32) {
    %c0_i32 = arith.constant 0 : i32
    %c0_i32_0 = arith.constant 0 : i32
    %c0_i32_1 = arith.constant 0 : i32
    return %arg0, %c0_i32, %c0_i32_0 : i32, i32, i32
  }
  func.func @transform_1(%arg0: i32) -> (i32, i32) {
    %c0_i32 = arith.constant 0 : i32
    %c0_i32_0 = arith.constant 0 : i32
    %c0_i32_1 = arith.constant 0 : i32
    return %c0_i32, %c0_i32_0 : i32, i32
  }
  func.func @transform_2(%arg0: i32) -> (i32, i32) {
    %c0_i32 = arith.constant 0 : i32
    %c0_i32_0 = arith.constant 0 : i32
    %c0_i32_1 = arith.constant 0 : i32
    return %c0_i32, %c0_i32_0 : i32, i32
  }
  func.func @transform_3(%arg0: i32) -> (i32, i32) {
    %c0_i32 = arith.constant 0 : i32
    %c0_i32_0 = arith.constant 0 : i32
    %c0_i32_1 = arith.constant 0 : i32
    return %c0_i32, %c0_i32_0 : i32, i32
  }
  func.func @transform_4(%arg0: i32) -> (i32, i32) {
    %c0_i32 = arith.constant 0 : i32
    %c0_i32_0 = arith.constant 0 : i32
    %c0_i32_1 = arith.constant 0 : i32
    return %c0_i32, %c0_i32_0 : i32, i32
  }
  func.func @transform_5(%arg0: i32) -> (i32, i32) {
    %c0_i32 = arith.constant 0 : i32
    %c0_i32_0 = arith.constant 0 : i32
    %c0_i32_1 = arith.constant 0 : i32
    return %c0_i32, %c0_i32_0 : i32, i32
  }
  func.func @transform_6(%arg0: i32) -> (i32, i32, i32) {
    %c0_i32 = arith.constant 0 : i32
    %c0_i32_0 = arith.constant 0 : i32
    %c0_i32_1 = arith.constant 0 : i32
    return %arg0, %c0_i32, %c0_i32_0 : i32, i32, i32
  }
}

</mosaic_0001>

<llo_original>
// kernel: tpu_custom_call.1
$region0: #{tpu_custom_call.1}
  #allocation0 [shape = 'u32[]', space=smem, size = 0x4, offset = 0x4, fixed_abs, tag = 'smem constant byte address 0x4 - core index']
  #allocation1 [shape = 'u32[72,128]{1,0:T(1,128)}', space=vmem, size = 0x9000, scoped, tag = 'internal scratch']
  #allocation2 [shape = 'f32[72,512]{1,0:T(8,128)}', space=vmem, size = 0x24000, scoped, tag = 'scratch operand']
  %s0 = inlined_call_operand.hbm [shape: f32[1,8,512], index: 0, kind: input, shape index: {}]
  %s1 = inlined_call_operand.hbm [shape: f32[9,512], index: 1, kind: input, shape index: {}]
  %s2 = inlined_call_operand.vmem [shape: f32[8,72], index: 2, kind: input, shape index: {}]
  %s3 = inlined_call_operand.vmem [shape: f32[8,1], index: 3, kind: input, shape index: {}]
  %s4 = inlined_call_operand.vmem [shape: f32[8,72], index: 4, kind: input, shape index: {}]
  %s5 = inlined_call_operand.vmem [shape: f32[8,1], index: 5, kind: input, shape index: {}]
  %s6 = inlined_call_operand.hbm [shape: f32[1,8,512], index: 6, kind: output, shape index: {}]
  %s7 = sld [smem:[#allocation0]]
  $region42: #{tpu_custom_call.1} parent=0
    _
  %s9 = ssub.s32 1, %s7
  %s10 = scalar_select 0, %s9, %s7
  $region1: #{tpu_custom_call.1} parent=0
    #allocation3 [shape = 'u8[16384]{0}', space=vmem, size = 0x4000, scoped, tag = 'input window, operand 0, single buffered']
    #allocation4 [shape = 's32[1]{0}', space=sflag, size = 0x4, scoped, tag = 'scoped memory for tpu_custom_call.1']
    #allocation5 [shape = 's32[1]{0}', space=sflag, size = 0x4, scoped, tag = 'scoped memory for tpu_custom_call.1']
    #allocation6 [shape = 'u8[32768]{0}', space=vmem, size = 0x8000, scoped, tag = 'input window, operand 1, single buffered']
    #allocation7 [shape = 's32[1]{0}', space=sflag, size = 0x4, scoped, tag = 'scoped memory for tpu_custom_call.1']
    #allocation8 [shape = 'u8[16384]{0}', space=vmem, size = 0x4000, scoped, tag = 'output window, operand 0, single buffered']
    %11 = vsyncpa [#allocation4], 0
    %12 = vsyncpa [#allocation7], 0
    %13 = vsyncpa [#allocation5], 0
    // Predicated region
    $region2: #{tpu_custom_call.1} parent=1 // pred_check
      _
    $region3: #{tpu_custom_call.1} parent=1 // pred_check_branch
      %15 = sbr.rel (0) target = $region5
    $region4: #{tpu_custom_call.1} parent=1 // pred_region
      %17 = vsyncadd [#allocation4], 0
      %s19 = sshll.u32 %s0, 4
      %s20 = int_to_ptr.hbm [resolvable:$true] %s19
      %s21 = sshll.u32 [#allocation3], 4
      %s22 = int_to_ptr.vmem [resolvable:$true] %s21
      %24 = dma.hbm_to_vmem [thread:$0]  %s20, 512, %s22, [#allocation4]
    $region5: #{tpu_custom_call.1} parent=1 // pred_fallthru
      _
    // Predicated region
    $region6: #{tpu_custom_call.1} parent=1 // pred_check
      _
    $region7: #{tpu_custom_call.1} parent=1 // pred_check_branch
      %26 = sbr.rel (0) target = $region9
    $region8: #{tpu_custom_call.1} parent=1 // pred_region
      %28 = vsyncadd [#allocation7], 0
      %s29 = sshll.u32 %s1, 4
      %s30 = int_to_ptr.hbm [resolvable:$true] %s29
      %s31 = sshll.u32 [#allocation6], 4
      %s32 = int_to_ptr.vmem [resolvable:$true] %s31
      %37 = dma.hbm_to_vmem [thread:$0]  %s30, 1024, %s32, [#allocation7], 512, 512, 32
    $region9: #{tpu_custom_call.1} parent=1 // pred_fallthru
      _
    // Predicated region
    $region10: #{tpu_custom_call.1} parent=1 // pred_check
      _
    $region11: #{tpu_custom_call.1} parent=1 // pred_check_branch
      %39 = sbr.rel (0) target = $region13
    $region12: #{tpu_custom_call.1} parent=1 // pred_region
      _
    $region13: #{tpu_custom_call.1} parent=1 // pred_fallthru
      _
    // Predicated region
    $region14: #{tpu_custom_call.1} parent=1 // pred_check
      _
    $region15: #{tpu_custom_call.1} parent=1 // pred_check_branch
      %41 = sbr.rel (0) target = $region17
    $region16: #{tpu_custom_call.1} parent=1 // pred_region
      _
    $region17: #{tpu_custom_call.1} parent=1 // pred_fallthru
      _
    // Predicated region
    $region18: #{tpu_custom_call.1} parent=1 // pred_check
      _
    $region19: #{tpu_custom_call.1} parent=1 // pred_check_branch
      %43 = sbr.rel (0) target = $region21
    $region20: #{tpu_custom_call.1} parent=1 // pred_region
      _
    $region21: #{tpu_custom_call.1} parent=1 // pred_fallthru
      _
    // Predicated region
    $region22: #{tpu_custom_call.1} parent=1 // pred_check
      _
    $region23: #{tpu_custom_call.1} parent=1 // pred_check_branch
      %45 = sbr.rel (0) target = $region25
    $region24: #{tpu_custom_call.1} parent=1 // pred_region
      _
    $region25: #{tpu_custom_call.1} parent=1 // pred_fallthru
      _
    // Predicated region
    $region26: #{tpu_custom_call.1} parent=1 // pred_check
      _
    $region27: #{tpu_custom_call.1} parent=1 // pred_check_branch
      %47 = sbr.rel (0) target = $region29
    $region28: #{tpu_custom_call.1} parent=1 // pred_region
      %49 = dma.done [#allocation4], 512
    $region29: #{tpu_custom_call.1} parent=1 // pred_fallthru
      _
    // Predicated region
    $region30: #{tpu_custom_call.1} parent=1 // pred_check
      _
    $region31: #{tpu_custom_call.1} parent=1 // pred_check_branch
      %51 = sbr.rel (0) target = $region33
    $region32: #{tpu_custom_call.1} parent=1 // pred_region
      %53 = dma.done [#allocation7], 1024
    $region33: #{tpu_custom_call.1} parent=1 // pred_fallthru
      _
    %v54 = vld [vmem:[#allocation3] sm:$0xff]
    %v55 = vld [vmem:[#allocation3 + $0x8] sm:$0xff]
    %v56 = vld [vmem:[#allocation3 + $0x10] sm:$0xff]
    %v57 = vld [vmem:[#allocation3 + $0x18] sm:$0xff]
    %v58 = vld [vmem:[#allocation6] sm:$0xff]
    %v59 = vld [vmem:[#allocation6 + $0x8] sm:$0xff]
    %v60 = vld [vmem:[#allocation6 + $0x10] sm:$0xff]
    %v61 = vld [vmem:[#allocation6 + $0x18] sm:$0xff]
    %v62 = vld [vmem:[#allocation6 + $0x20] sm:$0x1]
    %v63 = vld [vmem:[#allocation6 + $0x28] sm:$0x1]
    %v64 = vld [vmem:[#allocation6 + $0x30] sm:$0x1]
    %v65 = vld [vmem:[#allocation6 + $0x38] sm:$0x1]
    %v66 = vmul.f32 %v54, 0.01
    %v67 = vmul.f32 %v55, 0.01
    %v68 = vmul.f32 %v56, 0.01
    %v69 = vmul.f32 %v57, 0.01
    %v70 = vmax.f32 %v54, %v66
    %v71 = vmax.f32 %v55, %v67
    %v72 = vmax.f32 %v56, %v68
    %v73 = vmax.f32 %v57, %v69
    %v74 = vld [vmem:[%s2] sm:$0xff]
    %75 = vrot.lane.b32.xlu0 %v70, 17
    %v76 = vpop.permute.xlu0 %75
    %77 = vrot.lane.b32.xlu0 %v71, 17
    %v78 = vpop.permute.xlu0 %77
    %79 = vrot.lane.b32.xlu0 %v72, 17
    %v80 = vpop.permute.xlu0 %79
    %81 = vrot.lane.b32.xlu0 %v73, 17
    %v82 = vpop.permute.xlu0 %81
    %v83 = vlaneseq
    %v84 = vand.u32 %v83, 127
    %vm85 = vcmp.lt.s32.totalorder %v84, 17
    %v86 = vsel %vm85, %v80, %v82
    %v87 = vsel %vm85, %v78, %v80
    %v88 = vsel %vm85, %v76, %v78
    %v89 = vsel %vm85, %v82, %v76
    %v90 = vperm.slane %v58, 0
    %v91 = vperm.slane %v59, 0
    %v92 = vperm.slane %v60, 0
    %v93 = vperm.slane %v61, 0
    %v94 = vmul.f32 %v89, %v90
    %v95 = vmul.f32 %v88, %v91
    %v96 = vmul.f32 %v87, %v92
    %v97 = vmul.f32 %v86, %v93
    %98 = vst [vmem:[#allocation2] sm:$0xff] %v94
    %99 = vst [vmem:[#allocation2 + $0x8] sm:$0xff] %v95
    %100 = vst [vmem:[#allocation2 + $0x10] sm:$0xff] %v96
    %101 = vst [vmem:[#allocation2 + $0x18] sm:$0xff] %v97
    %102 = vrot.lane.b32.xlu0 %v70, 16
    %v103 = vpop.permute.xlu0 %102
    %104 = vrot.lane.b32.xlu0 %v71, 16
    %v105 = vpop.permute.xlu0 %104
    %106 = vrot.lane.b32.xlu0 %v72, 16
    %v107 = vpop.permute.xlu0 %106
    %108 = vrot.lane.b32.xlu0 %v73, 16
    %v109 = vpop.permute.xlu0 %108
    %vm110 = vcmp.lt.s32.totalorder %v84, 16
    %v111 = vsel %vm110, %v107, %v109
    %v112 = vsel %vm110, %v105, %v107
    %v113 = vsel %vm110, %v103, %v105
    %v114 = vsel %vm110, %v109, %v103
    %v115 = vperm.slane %v58, 1
    %v116 = vperm.slane %v59, 1
    %v117 = vperm.slane %v60, 1
    %v118 = vperm.slane %v61, 1
    %v119 = vmul.f32 %v114, %v115
    %v120 = vmul.f32 %v113, %v116
    %v121 = vmul.f32 %v112, %v117
    %v122 = vmul.f32 %v111, %v118
    %123 = vst [vmem:[#allocation2 + $0x20] sm:$0xff] %v119
    %124 = vst [vmem:[#allocation2 + $0x28] sm:$0xff] %v120
    %125 = vst [vmem:[#allocation2 + $0x30] sm:$0xff] %v121
    %126 = vst [vmem:[#allocation2 + $0x38] sm:$0xff] %v122
    %127 = vrot.lane.b32.xlu0 %v70, 15
    %v128 = vpop.permute.xlu0 %127
    %129 = vrot.lane.b32.xlu0 %v71, 15
    %v130 = vpop.permute.xlu0 %129
    %131 = vrot.lane.b32.xlu0 %v72, 15
    %v132 = vpop.permute.xlu0 %131
    %133 = vrot.lane.b32.xlu0 %v73, 15
    %v134 = vpop.permute.xlu0 %133
    %vm135 = vcmp.lt.s32.totalorder %v84, 15
    %v136 = vsel %vm135, %v132, %v134
    %v137 = vsel %vm135, %v130, %v132
    %v138 = vsel %vm135, %v128, %v130
    %v139 = vsel %vm135, %v134, %v128
    %v140 = vperm.slane %v58, 2
    %v141 = vperm.slane %v59, 2
    %v142 = vperm.slane %v60, 2
    %v143 = vperm.slane %v61, 2
    %v144 = vmul.f32 %v139, %v140
    %v145 = vmul.f32 %v138, %v141
    %v146 = vmul.f32 %v137, %v142
    %v147 = vmul.f32 %v136, %v143
    %148 = vst [vmem:[#allocation2 + $0x40] sm:$0xff] %v144
    %149 = vst [vmem:[#allocation2 + $0x48] sm:$0xff] %v145
    %150 = vst [vmem:[#allocation2 + $0x50] sm:$0xff] %v146
    %151 = vst [vmem:[#allocation2 + $0x58] sm:$0xff] %v147
    %152 = vrot.lane.b32.xlu0 %v70, 1
    %v153 = vpop.permute.xlu0 %152
    %154 = vrot.lane.b32.xlu0 %v71, 1
    %v155 = vpop.permute.xlu0 %154
    %156 = vrot.lane.b32.xlu0 %v72, 1
    %v157 = vpop.permute.xlu0 %156
    %158 = vrot.lane.b32.xlu0 %v73, 1
    %v159 = vpop.permute.xlu0 %158
    %vm160 = vcmp.lt.s32.totalorder %v84, 1
    %v161 = vsel %vm160, %v157, %v159
    %v162 = vsel %vm160, %v155, %v157
    %v163 = vsel %vm160, %v153, %v155
    %v164 = vsel %vm160, %v159, %v153
    %v165 = vperm.slane %v58, 3
    %v166 = vperm.slane %v59, 3
    %v167 = vperm.slane %v60, 3
    %v168 = vperm.slane %v61, 3
    %v169 = vmul.f32 %v164, %v165
    %v170 = vmul.f32 %v163, %v166
    %v171 = vmul.f32 %v162, %v167
    %v172 = vmul.f32 %v161, %v168
    %173 = vst [vmem:[#allocation2 + $0x60] sm:$0xff] %v169
    %174 = vst [vmem:[#allocation2 + $0x68] sm:$0xff] %v170
    %175 = vst [vmem:[#allocation2 + $0x70] sm:$0xff] %v171
    %176 = vst [vmem:[#allocation2 + $0x78] sm:$0xff] %v172
    %177 = vst [vmem:[#allocation2 + $0x80] sm:$0xff] %v70
    %178 = vst [vmem:[#allocation2 + $0x88] sm:$0xff] %v71
    %179 = vst [vmem:[#allocation2 + $0x90] sm:$0xff] %v72
    %180 = vst [vmem:[#allocation2 + $0x98] sm:$0xff] %v73
    %181 = vrot.lane.b32.xlu0 %v70, 127
    %v182 = vpop.permute.xlu0 %181
    %183 = vrot.lane.b32.xlu0 %v71, 127
    %v184 = vpop.permute.xlu0 %183
    %185 = vrot.lane.b32.xlu0 %v72, 127
    %v186 = vpop.permute.xlu0 %185
    %187 = vrot.lane.b32.xlu0 %v73, 127
    %v188 = vpop.permute.xlu0 %187
    %vm189 = vcmp.lt.s32.totalorder %v84, 127
    %v190 = vsel %vm189, %v186, %v188
    %v191 = vsel %vm189, %v184, %v186
    %v192 = vsel %vm189, %v182, %v184
    %v193 = vsel %vm189, %v188, %v182
    %v194 = vperm.slane %v58, 5
    %v195 = vperm.slane %v59, 5
    %v196 = vperm.slane %v60, 5
    %v197 = vperm.slane %v61, 5
    %v198 = vmul.f32 %v192, %v194
    %v199 = vmul.f32 %v191, %v195
    %v200 = vmul.f32 %v190, %v196
    %v201 = vmul.f32 %v193, %v197
    %202 = vst [vmem:[#allocation2 + $0xa0] sm:$0xff] %v198
    %203 = vst [vmem:[#allocation2 + $0xa8] sm:$0xff] %v199
    %204 = vst [vmem:[#allocation2 + $0xb0] sm:$0xff] %v200
    %205 = vst [vmem:[#allocation2 + $0xb8] sm:$0xff] %v201
    %206 = vrot.lane.b32.xlu0 %v70, 113
    %v207 = vpop.permute.xlu0 %206
    %208 = vrot.lane.b32.xlu0 %v71, 113
    %v209 = vpop.permute.xlu0 %208
    %210 = vrot.lane.b32.xlu0 %v72, 113
    %v211 = vpop.permute.xlu0 %210
    %212 = vrot.lane.b32.xlu0 %v73, 113
    %v213 = vpop.permute.xlu0 %212
    %vm214 = vcmp.lt.s32.totalorder %v84, 113
    %v215 = vsel %vm214, %v211, %v213
    %v216 = vsel %vm214, %v209, %v211
    %v217 = vsel %vm214, %v207, %v209
    %v218 = vsel %vm214, %v213, %v207
    %v219 = vperm.slane %v58, 6
    %v220 = vperm.slane %v59, 6
    %v221 = vperm.slane %v60, 6
    %v222 = vperm.slane %v61, 6
    %v223 = vmul.f32 %v217, %v219
    %v224 = vmul.f32 %v216, %v220
    %v225 = vmul.f32 %v215, %v221
    %v226 = vmul.f32 %v218, %v222
    %227 = vst [vmem:[#allocation2 + $0xc0] sm:$0xff] %v223
    %228 = vst [vmem:[#allocation2 + $0xc8] sm:$0xff] %v224
    %229 = vst [vmem:[#allocation2 + $0xd0] sm:$0xff] %v225
    %230 = vst [vmem:[#allocation2 + $0xd8] sm:$0xff] %v226
    %231 = vrot.lane.b32.xlu0 %v70, 112
    %v232 = vpop.permute.xlu0 %231
    %233 = vrot.lane.b32.xlu0 %v71, 112
    %v234 = vpop.permute.xlu0 %233
    %235 = vrot.lane.b32.xlu0 %v72, 112
    %v236 = vpop.permute.xlu0 %235
    %237 = vrot.lane.b32.xlu0 %v73, 112
    %v238 = vpop.permute.xlu0 %237
    %vm239 = vcmp.lt.s32.totalorder %v84, 112
    %v240 = vsel %vm239, %v236, %v238
    %v241 = vsel %vm239, %v234, %v236
    %v242 = vsel %vm239, %v232, %v234
    %v243 = vsel %vm239, %v238, %v232
    %v244 = vperm.slane %v58, 7
    %v245 = vperm.slane %v59, 7
    %v246 = vperm.slane %v60, 7
    %v247 = vperm.slane %v61, 7
    %v248 = vmul.f32 %v242, %v244
    %v249 = vmul.f32 %v241, %v245
    %v250 = vmul.f32 %v240, %v246
    %v251 = vmul.f32 %v243, %v247
    %252 = vst [vmem:[#allocation2 + $0xe0] sm:$0xff] %v248
    %253 = vst [vmem:[#allocation2 + $0xe8] sm:$0xff] %v249
    %254 = vst [vmem:[#allocation2 + $0xf0] sm:$0xff] %v250
    %255 = vst [vmem:[#allocation2 + $0xf8] sm:$0xff] %v251
    %256 = vrot.lane.b32.xlu0 %v70, 111
    %v257 = vpop.permute.xlu0 %256
    %258 = vrot.lane.b32.xlu0 %v71, 111
    %v259 = vpop.permute.xlu0 %258
    %260 = vrot.lane.b32.xlu0 %v72, 111
    %v261 = vpop.permute.xlu0 %260
    %262 = vrot.lane.b32.xlu0 %v73, 111
    %v263 = vpop.permute.xlu0 %262
    %vm264 = vcmp.lt.s32.totalorder %v84, 111
    %v265 = vsel %vm264, %v261, %v263
    %v266 = vsel %vm264, %v259, %v261
    %v267 = vsel %vm264, %v257, %v259
    %v268 = vsel %vm264, %v263, %v257
    %v269 = vperm.slane %v62, 0
    %v270 = vperm.slane %v63, 0
    %v271 = vperm.slane %v64, 0
    %v272 = vperm.slane %v65, 0
    %v273 = vmul.f32 %v267, %v269
    %v274 = vmul.f32 %v266, %v270
    %v275 = vmul.f32 %v265, %v271
    %v276 = vmul.f32 %v268, %v272
    %277 = vst [vmem:[#allocation2 + $0x100] sm:$0xff] %v273
    %278 = vst [vmem:[#allocation2 + $0x108] sm:$0xff] %v274
    %279 = vst [vmem:[#allocation2 + $0x110] sm:$0xff] %v275
    %280 = vst [vmem:[#allocation2 + $0x118] sm:$0xff] %v276
    %v281 = vld [vmem:[#allocation2] sm:$0xff]
    %v282 = vld [vmem:[#allocation2 + $0x8] sm:$0xff]
    %v283 = vld [vmem:[#allocation2 + $0x10] sm:$0xff]
    %v284 = vld [vmem:[#allocation2 + $0x18] sm:$0xff]
    %v285 = vld [vmem:[#allocation2 + $0x20] sm:$0xff]
    %v286 = vld [vmem:[#allocation2 + $0x28] sm:$0xff]
    %v287 = vld [vmem:[#allocation2 + $0x30] sm:$0xff]
    %v288 = vld [vmem:[#allocation2 + $0x38] sm:$0xff]
    %v289 = vld [vmem:[#allocation2 + $0x40] sm:$0xff]
    %v290 = vld [vmem:[#allocation2 + $0x48] sm:$0xff]
    %v291 = vld [vmem:[#allocation2 + $0x50] sm:$0xff]
    %v292 = vld [vmem:[#allocation2 + $0x58] sm:$0xff]
    %v293 = vld [vmem:[#allocation2 + $0x60] sm:$0xff]
    %v294 = vld [vmem:[#allocation2 + $0x68] sm:$0xff]
    %v295 = vld [vmem:[#allocation2 + $0x70] sm:$0xff]
    %v296 = vld [vmem:[#allocation2 + $0x78] sm:$0xff]
    %v297 = vld [vmem:[#allocation2 + $0x80] sm:$0xff]
    %v298 = vld [vmem:[#allocation2 + $0x88] sm:$0xff]
    %v299 = vld [vmem:[#allocation2 + $0x90] sm:$0xff]
    %v300 = vld [vmem:[#allocation2 + $0x98] sm:$0xff]
    %v301 = vld [vmem:[#allocation2 + $0xa0] sm:$0xff]
    %v302 = vld [vmem:[#allocation2 + $0xa8] sm:$0xff]
    %v303 = vld [vmem:[#allocation2 + $0xb0] sm:$0xff]
    %v304 = vld [vmem:[#allocation2 + $0xb8] sm:$0xff]
    %v305 = vld [vmem:[#allocation2 + $0xc0] sm:$0xff]
    %v306 = vld [vmem:[#allocation2 + $0xc8] sm:$0xff]
    %v307 = vld [vmem:[#allocation2 + $0xd0] sm:$0xff]
    %v308 = vld [vmem:[#allocation2 + $0xd8] sm:$0xff]
    %v309 = vld [vmem:[#allocation2 + $0xe0] sm:$0xff]
    %v310 = vld [vmem:[#allocation2 + $0xe8] sm:$0xff]
    %v311 = vld [vmem:[#allocation2 + $0xf0] sm:$0xff]
    %v312 = vld [vmem:[#allocation2 + $0xf8] sm:$0xff]
    %v313 = vld [vmem:[#allocation2 + $0x100] sm:$0xff]
    %v314 = vld [vmem:[#allocation2 + $0x108] sm:$0xff]
    %v315 = vld [vmem:[#allocation2 + $0x110] sm:$0xff]
    %v316 = vld [vmem:[#allocation2 + $0x118] sm:$0xff]
    %v317 = vld [vmem:[%s3] sm:$0xff]
    %319 = vset.pattern.permute.xlu0 0
    %320 = vperm.xlu0 %319, %v317
    %v321 = vpop.permute.xlu0 %320
    %vm323 = vcmask 588800
    %v325 = vsel %vm323, %v74, 0
    %327 = vmatpush.msra.mxu0 0.0
    %328 = vmatpush.msra.mxu0 0.0
    %329 = vmatpush.msra.mxu0 0.0
    %330 = vmatpush.msra.mxu0 0.0
    %331 = vmatpush.msra.mxu0 0.0
    %332 = vmatpush.msra.mxu0 0.0
    %333 = vmatpush.msra.mxu0 0.0
    %334 = vmatpush.msra.mxu0 %v313
    %335 = vmatpush.msra.mxu0 %v309
    %336 = vmatpush.msra.mxu0 %v305
    %337 = vmatpush.msra.mxu0 %v301
    %338 = vmatpush.msra.mxu0 %v297
    %339 = vmatpush.msra.mxu0 %v293
    %340 = vmatpush.msra.mxu0 %v289
    %341 = vmatpush.msra.mxu0 %v285
    %342 = vmatpush.msra.mxu0 %v281
    %343 = vmatmul.f32.gmra.mxu0 %v325
    %v344 = vpop.f32.mrf.mxu0
    %v345 = vadd.f32 %v321, %v344
    %346 = vdwg.mxu0
    %347 = vmatpush.msra.mxu0 0.0
    %348 = vmatpush.msra.mxu0 0.0
    %349 = vmatpush.msra.mxu0 0.0
    %350 = vmatpush.msra.mxu0 0.0
    %351 = vmatpush.msra.mxu0 0.0
    %352 = vmatpush.msra.mxu0 0.0
    %353 = vmatpush.msra.mxu0 0.0
    %354 = vmatpush.msra.mxu0 %v314
    %355 = vmatpush.msra.mxu0 %v310
    %356 = vmatpush.msra.mxu0 %v306
    %357 = vmatpush.msra.mxu0 %v302
    %358 = vmatpush.msra.mxu0 %v298
    %359 = vmatpush.msra.mxu0 %v294
    %360 = vmatpush.msra.mxu0 %v290
    %361 = vmatpush.msra.mxu0 %v286
    %362 = vmatpush.msra.mxu0 %v282
    %363 = vmatmul.f32.gmra.mxu0 %v325
    %v364 = vpop.f32.mrf.mxu0
    %v365 = vadd.f32 %v321, %v364
    %366 = vdwg.mxu0
    %367 = vmatpush.msra.mxu0 0.0
    %368 = vmatpush.msra.mxu0 0.0
    %369 = vmatpush.msra.mxu0 0.0
    %370 = vmatpush.msra.mxu0 0.0
    %371 = vmatpush.msra.mxu0 0.0
    %372 = vmatpush.msra.mxu0 0.0
    %373 = vmatpush.msra.mxu0 0.0
    %374 = vmatpush.msra.mxu0 %v315
    %375 = vmatpush.msra.mxu0 %v311
    %376 = vmatpush.msra.mxu0 %v307
    %377 = vmatpush.msra.mxu0 %v303
    %378 = vmatpush.msra.mxu0 %v299
    %379 = vmatpush.msra.mxu0 %v295
    %380 = vmatpush.msra.mxu0 %v291
    %381 = vmatpush.msra.mxu0 %v287
    %382 = vmatpush.msra.mxu0 %v283
    %383 = vmatmul.f32.gmra.mxu0 %v325
    %v384 = vpop.f32.mrf.mxu0
    %v385 = vadd.f32 %v321, %v384
    %386 = vdwg.mxu0
    %387 = vmatpush.msra.mxu0 0.0
    %388 = vmatpush.msra.mxu0 0.0
    %389 = vmatpush.msra.mxu0 0.0
    %390 = vmatpush.msra.mxu0 0.0
    %391 = vmatpush.msra.mxu0 0.0
    %392 = vmatpush.msra.mxu0 0.0
    %393 = vmatpush.msra.mxu0 0.0
    %394 = vmatpush.msra.mxu0 %v316
    %395 = vmatpush.msra.mxu0 %v312
    %396 = vmatpush.msra.mxu0 %v308
    %397 = vmatpush.msra.mxu0 %v304
    %398 = vmatpush.msra.mxu0 %v300
    %399 = vmatpush.msra.mxu0 %v296
    %400 = vmatpush.msra.mxu0 %v292
    %401 = vmatpush.msra.mxu0 %v288
    %402 = vmatpush.msra.mxu0 %v284
    %403 = vmatmul.f32.gmra.mxu0 %v325
    %v404 = vpop.f32.mrf.mxu0
    %v405 = vadd.f32 %v321, %v404
    %406 = vdwg.mxu0
    %v407 = vmul.f32 %v345, 0.01
    %v408 = vmul.f32 %v365, 0.01
    %v409 = vmul.f32 %v385, 0.01
    %v410 = vmul.f32 %v405, 0.01
    %v411 = vmax.f32 %v345, %v407
    %v412 = vmax.f32 %v365, %v408
    %v413 = vmax.f32 %v385, %v409
    %v414 = vmax.f32 %v405, %v410
    %v415 = vld [vmem:[%s4] sm:$0xff]
    %416 = vrot.lane.b32.xlu0 %v411, 17
    %v417 = vpop.permute.xlu0 %416
    %418 = vrot.lane.b32.xlu0 %v412, 17
    %v419 = vpop.permute.xlu0 %418
    %420 = vrot.lane.b32.xlu0 %v413, 17
    %v421 = vpop.permute.xlu0 %420
    %422 = vrot.lane.b32.xlu0 %v414, 17
    %v423 = vpop.permute.xlu0 %422
    %v424 = vsel %vm85, %v421, %v423
    %v425 = vsel %vm85, %v419, %v421
    %v426 = vsel %vm85, %v417, %v419
    %v427 = vsel %vm85, %v423, %v417
    %v428 = vmul.f32 %v427, %v90
    %v429 = vmul.f32 %v426, %v91
    %v430 = vmul.f32 %v425, %v92
    %v431 = vmul.f32 %v424, %v93
    %432 = vst [vmem:[#allocation2] sm:$0xff] %v428
    %433 = vst [vmem:[#allocation2 + $0x8] sm:$0xff] %v429
    %434 = vst [vmem:[#allocation2 + $0x10] sm:$0xff] %v430
    %435 = vst [vmem:[#allocation2 + $0x18] sm:$0xff] %v431
    %436 = vrot.lane.b32.xlu0 %v411, 16
    %v437 = vpop.permute.xlu0 %436
    %438 = vrot.lane.b32.xlu0 %v412, 16
    %v439 = vpop.permute.xlu0 %438
    %440 = vrot.lane.b32.xlu0 %v413, 16
    %v441 = vpop.permute.xlu0 %440
    %442 = vrot.lane.b32.xlu0 %v414, 16
    %v443 = vpop.permute.xlu0 %442
    %v444 = vsel %vm110, %v441, %v443
    %v445 = vsel %vm110, %v439, %v441
    %v446 = vsel %vm110, %v437, %v439
    %v447 = vsel %vm110, %v443, %v437
    %v448 = vmul.f32 %v447, %v115
    %v449 = vmul.f32 %v446, %v116
    %v450 = vmul.f32 %v445, %v117
    %v451 = vmul.f32 %v444, %v118
    %452 = vst [vmem:[#allocation2 + $0x20] sm:$0xff] %v448
    %453 = vst [vmem:[#allocation2 + $0x28] sm:$0xff] %v449
    %454 = vst [vmem:[#allocation2 + $0x30] sm:$0xff] %v450
    %455 = vst [vmem:[#allocation2 + $0x38] sm:$0xff] %v451
    %456 = vrot.lane.b32.xlu0 %v411, 15
    %v457 = vpop.permute.xlu0 %456
    %458 = vrot.lane.b32.xlu0 %v412, 15
    %v459 = vpop.permute.xlu0 %458
    %460 = vrot.lane.b32.xlu0 %v413, 15
    %v461 = vpop.permute.xlu0 %460
    %462 = vrot.lane.b32.xlu0 %v414, 15
    %v463 = vpop.permute.xlu0 %462
    %v464 = vsel %vm135, %v461, %v463
    %v465 = vsel %vm135, %v459, %v461
    %v466 = vsel %vm135, %v457, %v459
    %v467 = vsel %vm135, %v463, %v457
    %v468 = vmul.f32 %v467, %v140
    %v469 = vmul.f32 %v466, %v141
    %v470 = vmul.f32 %v465, %v142
    %v471 = vmul.f32 %v464, %v143
    %472 = vst [vmem:[#allocation2 + $0x40] sm:$0xff] %v468
    %473 = vst [vmem:[#allocation2 + $0x48] sm:$0xff] %v469
    %474 = vst [vmem:[#allocation2 + $0x50] sm:$0xff] %v470
    %475 = vst [vmem:[#allocation2 + $0x58] sm:$0xff] %v471
    %476 = vrot.lane.b32.xlu0 %v411, 1
    %v477 = vpop.permute.xlu0 %476
    %478 = vrot.lane.b32.xlu0 %v412, 1
    %v479 = vpop.permute.xlu0 %478
    %480 = vrot.lane.b32.xlu0 %v413, 1
    %v481 = vpop.permute.xlu0 %480
    %482 = vrot.lane.b32.xlu0 %v414, 1
    %v483 = vpop.permute.xlu0 %482
    %v484 = vsel %vm160, %v481, %v483
    %v485 = vsel %vm160, %v479, %v481
    %v486 = vsel %vm160, %v477, %v479
    %v487 = vsel %vm160, %v483, %v477
    %v488 = vmul.f32 %v487, %v165
    %v489 = vmul.f32 %v486, %v166
    %v490 = vmul.f32 %v485, %v167
    %v491 = vmul.f32 %v484, %v168
    %492 = vst [vmem:[#allocation2 + $0x60] sm:$0xff] %v488
    %493 = vst [vmem:[#allocation2 + $0x68] sm:$0xff] %v489
    %494 = vst [vmem:[#allocation2 + $0x70] sm:$0xff] %v490
    %495 = vst [vmem:[#allocation2 + $0x78] sm:$0xff] %v491
    %496 = vst [vmem:[#allocation2 + $0x80] sm:$0xff] %v411
    %497 = vst [vmem:[#allocation2 + $0x88] sm:$0xff] %v412
    %498 = vst [vmem:[#allocation2 + $0x90] sm:$0xff] %v413
    %499 = vst [vmem:[#allocation2 + $0x98] sm:$0xff] %v414
    %500 = vrot.lane.b32.xlu0 %v411, 127
    %v501 = vpop.permute.xlu0 %500
    %502 = vrot.lane.b32.xlu0 %v412, 127
    %v503 = vpop.permute.xlu0 %502
    %504 = vrot.lane.b32.xlu0 %v413, 127
    %v505 = vpop.permute.xlu0 %504
    %506 = vrot.lane.b32.xlu0 %v414, 127
    %v507 = vpop.permute.xlu0 %506
    %v508 = vsel %vm189, %v505, %v507
    %v509 = vsel %vm189, %v503, %v505
    %v510 = vsel %vm189, %v501, %v503
    %v511 = vsel %vm189, %v507, %v501
    %v512 = vmul.f32 %v510, %v194
    %v513 = vmul.f32 %v509, %v195
    %v514 = vmul.f32 %v508, %v196
    %v515 = vmul.f32 %v511, %v197
    %516 = vst [vmem:[#allocation2 + $0xa0] sm:$0xff] %v512
    %517 = vst [vmem:[#allocation2 + $0xa8] sm:$0xff] %v513
    %518 = vst [vmem:[#allocation2 + $0xb0] sm:$0xff] %v514
    %519 = vst [vmem:[#allocation2 + $0xb8] sm:$0xff] %v515
    %520 = vrot.lane.b32.xlu0 %v411, 113
    %v521 = vpop.permute.xlu0 %520
    %522 = vrot.lane.b32.xlu0 %v412, 113
    %v523 = vpop.permute.xlu0 %522
    %524 = vrot.lane.b32.xlu0 %v413, 113
    %v525 = vpop.permute.xlu0 %524
    %526 = vrot.lane.b32.xlu0 %v414, 113
    %v527 = vpop.permute.xlu0 %526
    %v528 = vsel %vm214, %v525, %v527
    %v529 = vsel %vm214, %v523, %v525
    %v530 = vsel %vm214, %v521, %v523
    %v531 = vsel %vm214, %v527, %v521
    %v532 = vmul.f32 %v530, %v219
    %v533 = vmul.f32 %v529, %v220
    %v534 = vmul.f32 %v528, %v221
    %v535 = vmul.f32 %v531, %v222
    %536 = vst [vmem:[#allocation2 + $0xc0] sm:$0xff] %v532
    %537 = vst [vmem:[#allocation2 + $0xc8] sm:$0xff] %v533
    %538 = vst [vmem:[#allocation2 + $0xd0] sm:$0xff] %v534
    %539 = vst [vmem:[#allocation2 + $0xd8] sm:$0xff] %v535
    %540 = vrot.lane.b32.xlu0 %v411, 112
    %v541 = vpop.permute.xlu0 %540
    %542 = vrot.lane.b32.xlu0 %v412, 112
    %v543 = vpop.permute.xlu0 %542
    %544 = vrot.lane.b32.xlu0 %v413, 112
    %v545 = vpop.permute.xlu0 %544
    %546 = vrot.lane.b32.xlu0 %v414, 112
    %v547 = vpop.permute.xlu0 %546
    %v548 = vsel %vm239, %v545, %v547
    %v549 = vsel %vm239, %v543, %v545
    %v550 = vsel %vm239, %v541, %v543
    %v551 = vsel %vm239, %v547, %v541
    %v552 = vmul.f32 %v550, %v244
    %v553 = vmul.f32 %v549, %v245
    %v554 = vmul.f32 %v548, %v246
    %v555 = vmul.f32 %v551, %v247
    %556 = vst [vmem:[#allocation2 + $0xe0] sm:$0xff] %v552
    %557 = vst [vmem:[#allocation2 + $0xe8] sm:$0xff] %v553
    %558 = vst [vmem:[#allocation2 + $0xf0] sm:$0xff] %v554
    %559 = vst [vmem:[#allocation2 + $0xf8] sm:$0xff] %v555
    %560 = vrot.lane.b32.xlu0 %v411, 111
    %v561 = vpop.permute.xlu0 %560
    %562 = vrot.lane.b32.xlu0 %v412, 111
    %v563 = vpop.permute.xlu0 %562
    %564 = vrot.lane.b32.xlu0 %v413, 111
    %v565 = vpop.permute.xlu0 %564
    %566 = vrot.lane.b32.xlu0 %v414, 111
    %v567 = vpop.permute.xlu0 %566
    %v568 = vsel %vm264, %v565, %v567
    %v569 = vsel %vm264, %v563, %v565
    %v570 = vsel %vm264, %v561, %v563
    %v571 = vsel %vm264, %v567, %v561
    %v572 = vmul.f32 %v570, %v269
    %v573 = vmul.f32 %v569, %v270
    %v574 = vmul.f32 %v568, %v271
    %v575 = vmul.f32 %v571, %v272
    %576 = vst [vmem:[#allocation2 + $0x100] sm:$0xff] %v572
    %577 = vst [vmem:[#allocation2 + $0x108] sm:$0xff] %v573
    %578 = vst [vmem:[#allocation2 + $0x110] sm:$0xff] %v574
    %579 = vst [vmem:[#allocation2 + $0x118] sm:$0xff] %v575
    %v580 = vld [vmem:[#allocation2] sm:$0xff]
    %v581 = vld [vmem:[#allocation2 + $0x8] sm:$0xff]
    %v582 = vld [vmem:[#allocation2 + $0x10] sm:$0xff]
    %v583 = vld [vmem:[#allocation2 + $0x18] sm:$0xff]
    %v584 = vld [vmem:[#allocation2 + $0x20] sm:$0xff]
    %v585 = vld [vmem:[#allocation2 + $0x28] sm:$0xff]
    %v586 = vld [vmem:[#allocation2 + $0x30] sm:$0xff]
    %v587 = vld [vmem:[#allocation2 + $0x38] sm:$0xff]
    %v588 = vld [vmem:[#allocation2 + $0x40] sm:$0xff]
    %v589 = vld [vmem:[#allocation2 + $0x48] sm:$0xff]
    %v590 = vld [vmem:[#allocation2 + $0x50] sm:$0xff]
    %v591 = vld [vmem:[#allocation2 + $0x58] sm:$0xff]
    %v592 = vld [vmem:[#allocation2 + $0x60] sm:$0xff]
    %v593 = vld [vmem:[#allocation2 + $0x68] sm:$0xff]
    %v594 = vld [vmem:[#allocation2 + $0x70] sm:$0xff]
    %v595 = vld [vmem:[#allocation2 + $0x78] sm:$0xff]
    %v596 = vld [vmem:[#allocation2 + $0x80] sm:$0xff]
    %v597 = vld [vmem:[#allocation2 + $0x88] sm:$0xff]
    %v598 = vld [vmem:[#allocation2 + $0x90] sm:$0xff]
    %v599 = vld [vmem:[#allocation2 + $0x98] sm:$0xff]
    %v600 = vld [vmem:[#allocation2 + $0xa0] sm:$0xff]
    %v601 = vld [vmem:[#allocation2 + $0xa8] sm:$0xff]
    %v602 = vld [vmem:[#allocation2 + $0xb0] sm:$0xff]
    %v603 = vld [vmem:[#allocation2 + $0xb8] sm:$0xff]
    %v604 = vld [vmem:[#allocation2 + $0xc0] sm:$0xff]
    %v605 = vld [vmem:[#allocation2 + $0xc8] sm:$0xff]
    %v606 = vld [vmem:[#allocation2 + $0xd0] sm:$0xff]
    %v607 = vld [vmem:[#allocation2 + $0xd8] sm:$0xff]
    %v608 = vld [vmem:[#allocation2 + $0xe0] sm:$0xff]
    %v609 = vld [vmem:[#allocation2 + $0xe8] sm:$0xff]
    %v610 = vld [vmem:[#allocation2 + $0xf0] sm:$0xff]
    %v611 = vld [vmem:[#allocation2 + $0xf8] sm:$0xff]
    %v612 = vld [vmem:[#allocation2 + $0x100] sm:$0xff]
    %v613 = vld [vmem:[#allocation2 + $0x108] sm:$0xff]
    %v614 = vld [vmem:[#allocation2 + $0x110] sm:$0xff]
    %v615 = vld [vmem:[#allocation2 + $0x118] sm:$0xff]
    %v617 = vsel %vm323, %v415, 0
    %619 = vmatpush.msra.mxu0 0.0
    %620 = vmatpush.msra.mxu0 0.0
    %621 = vmatpush.msra.mxu0 0.0
    %622 = vmatpush.msra.mxu0 0.0
    %623 = vmatpush.msra.mxu0 0.0
    %624 = vmatpush.msra.mxu0 0.0
    %625 = vmatpush.msra.mxu0 0.0
    %626 = vmatpush.msra.mxu0 %v612
    %627 = vmatpush.msra.mxu0 %v608
    %628 = vmatpush.msra.mxu0 %v604
    %629 = vmatpush.msra.mxu0 %v600
    %630 = vmatpush.msra.mxu0 %v596
    %631 = vmatpush.msra.mxu0 %v592
    %632 = vmatpush.msra.mxu0 %v588
    %633 = vmatpush.msra.mxu0 %v584
    %634 = vmatpush.msra.mxu0 %v580
    %635 = vmatmul.f32.gmra.mxu0 %v617
    %v636 = vpop.f32.mrf.mxu0
    %v637 = vadd.f32 0.0, %v636
    %638 = vdwg.mxu0
    %639 = vmatpush.msra.mxu0 0.0
    %640 = vmatpush.msra.mxu0 0.0
    %641 = vmatpush.msra.mxu0 0.0
    %642 = vmatpush.msra.mxu0 0.0
    %643 = vmatpush.msra.mxu0 0.0
    %644 = vmatpush.msra.mxu0 0.0
    %645 = vmatpush.msra.mxu0 0.0
    %646 = vmatpush.msra.mxu0 %v613
    %647 = vmatpush.msra.mxu0 %v609
    %648 = vmatpush.msra.mxu0 %v605
    %649 = vmatpush.msra.mxu0 %v601
    %650 = vmatpush.msra.mxu0 %v597
    %651 = vmatpush.msra.mxu0 %v593
    %652 = vmatpush.msra.mxu0 %v589
    %653 = vmatpush.msra.mxu0 %v585
    %654 = vmatpush.msra.mxu0 %v581
    %655 = vmatmul.f32.gmra.mxu0 %v617
    %v656 = vpop.f32.mrf.mxu0
    %v657 = vadd.f32 0.0, %v656
    %658 = vdwg.mxu0
    %659 = vmatpush.msra.mxu0 0.0
    %660 = vmatpush.msra.mxu0 0.0
    %661 = vmatpush.msra.mxu0 0.0
    %662 = vmatpush.msra.mxu0 0.0
    %663 = vmatpush.msra.mxu0 0.0
    %664 = vmatpush.msra.mxu0 0.0
    %665 = vmatpush.msra.mxu0 0.0
    %666 = vmatpush.msra.mxu0 %v614
    %667 = vmatpush.msra.mxu0 %v610
    %668 = vmatpush.msra.mxu0 %v606
    %669 = vmatpush.msra.mxu0 %v602
    %670 = vmatpush.msra.mxu0 %v598
    %671 = vmatpush.msra.mxu0 %v594
    %672 = vmatpush.msra.mxu0 %v590
    %673 = vmatpush.msra.mxu0 %v586
    %674 = vmatpush.msra.mxu0 %v582
    %675 = vmatmul.f32.gmra.mxu0 %v617
    %v676 = vpop.f32.mrf.mxu0
    %v677 = vadd.f32 0.0, %v676
    %678 = vdwg.mxu0
    %679 = vmatpush.msra.mxu0 0.0
    %680 = vmatpush.msra.mxu0 0.0
    %681 = vmatpush.msra.mxu0 0.0
    %682 = vmatpush.msra.mxu0 0.0
    %683 = vmatpush.msra.mxu0 0.0
    %684 = vmatpush.msra.mxu0 0.0
    %685 = vmatpush.msra.mxu0 0.0
    %686 = vmatpush.msra.mxu0 %v615
    %687 = vmatpush.msra.mxu0 %v611
    %688 = vmatpush.msra.mxu0 %v607
    %689 = vmatpush.msra.mxu0 %v603
    %690 = vmatpush.msra.mxu0 %v599
    %691 = vmatpush.msra.mxu0 %v595
    %692 = vmatpush.msra.mxu0 %v591
    %693 = vmatpush.msra.mxu0 %v587
    %694 = vmatpush.msra.mxu0 %v583
    %695 = vmatmul.f32.gmra.mxu0 %v617
    %v696 = vpop.f32.mrf.mxu0
    %v697 = vadd.f32 0.0, %v696
    %698 = vdwg.mxu0
    %v699 = vadd.f32 %v54, %v637
    %v700 = vadd.f32 %v55, %v657
    %v701 = vadd.f32 %v56, %v677
    %v702 = vadd.f32 %v57, %v697
    %v703 = vld [vmem:[%s5] sm:$0xff]
    %705 = vset.pattern.permute.xlu0 0
    %706 = vperm.xlu0 %705, %v703
    %v707 = vpop.permute.xlu0 %706
    %v709 = vadd.f32 %v699, %v707
    %v710 = vadd.f32 %v700, %v707
    %v711 = vadd.f32 %v701, %v707
    %v712 = vadd.f32 %v702, %v707
    %713 = vst [vmem:[#allocation8] sm:$0xff] %v709
    %714 = vst [vmem:[#allocation8 + $0x8] sm:$0xff] %v710
    %715 = vst [vmem:[#allocation8 + $0x10] sm:$0xff] %v711
    %716 = vst [vmem:[#allocation8 + $0x18] sm:$0xff] %v712
    // Predicated region
    $region34: #{tpu_custom_call.1} parent=1 // pred_check
      _
    $region35: #{tpu_custom_call.1} parent=1 // pred_check_branch
      %718 = sbr.rel (0) target = $region37
    $region36: #{tpu_custom_call.1} parent=1 // pred_region
      %720 = vsyncadd [#allocation5], 0
      %s722 = sshll.u32 [#allocation8], 4
      %s723 = int_to_ptr.vmem [resolvable:$true] %s722
      %s724 = sshll.u32 %s6, 4
      %s725 = int_to_ptr.hbm [resolvable:$true] %s724
      %727 = dma.vmem_to_hbm [thread:$0]  %s723, 512, %s725, [#allocation5]
    $region37: #{tpu_custom_call.1} parent=1 // pred_fallthru
      _
    // Predicated region
    $region38: #{tpu_custom_call.1} parent=1 // pred_check
      _
    $region39: #{tpu_custom_call.1} parent=1 // pred_check_branch
      %729 = sbr.rel (0) target = $region41
    $region40: #{tpu_custom_call.1} parent=1 // pred_region
      %731 = dma.done [#allocation5], 512
    $region41: #{tpu_custom_call.1} parent=1 // pred_fallthru
      _
    %732 = vsyncpa [#allocation4], 1
    %733 = vsyncpa [#allocation7], 1
    %734 = vsyncpa [#allocation5], 1

</llo_original>
